<compile_context>
chip_gen: v5e
topology: v5e:2x2
jax: 0.10.0
libtpu: 0.0.40
codegen_flags: <defaults>
</compile_context>

<pallas_src>
import jax
import jax.numpy as jnp
from jax.experimental import pallas as pl
from jax.experimental.pallas import tpu as pltpu


def _round_up(n, m):
    return ((n + m - 1) // m) * m


def _choose_tile_b(batch, tile_b):
    """Pick the batch tile.

    * batch <= 256: a single full-extent block (block == array dims is always
      a legal BlockSpec; no padding / divisibility issues).
    * otherwise: a multiple of 128 (lane-dense (1, tile) output block), capped
      by the requested tile_b, and small enough that the grid has >= 2 steps
      so v7x megacore can shard the "parallel" batch axis across both TCs.
    """
    if batch <= 256:
        return batch
    tile = _round_up(min(tile_b, batch), 128)
    if pl.cdiv(batch, tile) < 2:
        tile = _round_up(pl.cdiv(batch, 2), 128)
    return tile


def _mlp_kernel(x_ref, w1t_ref, b1_ref, w2t_ref, b2_ref, w3_ref, b3_ref, o_ref):
    # x arrives as f32 [TILE_B, D]; cast to bf16 in-register (one VPU op per
    # vreg, essentially free) instead of a separate wrapper-side HBM pass.
    x = x_ref[...].astype(jnp.bfloat16)

    # Layer 1: h1t[H1, TILE_B] = W1^T[H1, D] . x^T[D, TILE_B], written as a
    # last-dim contraction so the MXU consumes x without an explicit transpose
    # and the streamed M dimension is H1 (64), not TILE_B.
    h1t = jax.lax.dot_general(
        w1t_ref[...], x,
        dimension_numbers=(((1,), (1,)), ((), ())),
        preferred_element_type=jnp.float32,
    )
    h1t = jnp.maximum(h1t + b1_ref[...], 0.0)      # bias + ReLU (Dropout = id)

    # Layer 2: h2t[H2, TILE_B] = W2^T[H2, H1] . h1t[H1, TILE_B].
    h2t = jnp.dot(w2t_ref[...], h1t.astype(jnp.bfloat16),
                  preferred_element_type=jnp.float32)
    h2t = jnp.maximum(h2t + b2_ref[...], 0.0)      # bias + ReLU (Dropout = id)

    # Layer 3 (out_features == 1): VPU multiply + sublane reduce instead of a
    # degenerate 1-column MXU matmul; result is a lane-dense [1, TILE_B] row.
    logits = jnp.sum(h2t * w3_ref[...], axis=0, keepdims=True) + b3_ref[0, 0]
    o_ref[...] = jax.nn.sigmoid(logits).astype(o_ref.dtype)


def bot_detect_mlp(x, params, *, tile_b=4096):
    """Fused BotDetectMLP forward. x: [B, input_size] float32 -> [B, 1] f32."""
    B, D = x.shape
    H1 = params["w1"].shape[1]
    H2 = params["w2"].shape[1]

    # Param-side preprocessing only (a few KiB; the x stream is untouched).
    w1t = params["w1"].T.astype(jnp.bfloat16)             # [H1, D]
    w2t = params["w2"].T.astype(jnp.bfloat16)             # [H2, H1]
    b1 = params["b1"].reshape(H1, 1).astype(jnp.float32)  # column bias
    b2 = params["b2"].reshape(H2, 1).astype(jnp.float32)  # column bias
    w3 = params["w3"].reshape(H2, 1).astype(jnp.float32)  # column for sublane reduce
    b3 = params["b3"].reshape(1, 1).astype(jnp.float32)   # SMEM scalar

    tile = _choose_tile_b(B, tile_b)
    grid = (pl.cdiv(B, tile),)      # ragged trailing block masked by Pallas

    resident = lambda shape: pl.BlockSpec(shape, lambda i: (0, 0))

    # Advisory hint so XLA schedules neighbouring ops around the call sensibly.
    cost = pl.CostEstimate(
        flops=2 * B * (D * H1 + H1 * H2 + H2),
        transcendentals=B,                                   # sigmoid
        bytes_accessed=(B * D * 4 + B * 4
                        + (w1t.size + w2t.size) * 2
                        + (b1.size + b2.size + w3.size + b3.size) * 4),
    )

    out = pl.pallas_call(
        _mlp_kernel,
        out_shape=jax.ShapeDtypeStruct((1, B), jnp.float32),
        grid=grid,
        in_specs=[
            # x: streamed per tile in f32 (BlockSpec double-buffers the DMA).
            # v5e knob if the x DMA is still exposed: pipeline_mode=pl.Buffered(3).
            pl.BlockSpec((tile, D), lambda i: (i, 0)),
            resident((H1, D)),                                # W1^T (VMEM-resident)
            resident((H1, 1)),                                # b1 column
            resident((H2, H1)),                               # W2^T
            resident((H2, 1)),                                # b2 column
            resident((H2, 1)),                                # w3 column
            pl.BlockSpec(memory_space=pltpu.MemorySpace.SMEM),  # b3 scalar
        ],
        out_specs=pl.BlockSpec((1, tile), lambda i: (0, i)),  # lane-dense output
        compiler_params=pltpu.CompilerParams(
            # Batch axis is embarrassingly parallel -> megacore sharding on v7x.
            dimension_semantics=("parallel",),
            # Headroom for large tiles: the [tile, 32] f32 x block is lane-padded
            # to 128 lanes in VMEM (~4x), so tile=8192 needs ~8 MiB just for the
            # double-buffered x.  32 MiB is safe on v5e / v6e / v7x.
            vmem_limit_bytes=32 * 1024 * 1024,
        ),
        cost_estimate=cost,
    )(x, w1t, b1, w2t, b2, w3, b3)

    # (1, B) -> (B, 1): identical linear order, layout-only reshape in XLA.
    return out.reshape(B, 1)


def init_params(key, input_size, hidden1, hidden2):
    """Deterministic synthetic init (uniform, PyTorch-Linear-style bounds)."""
    ks = jax.random.split(key, 6)

    def linear(kw, kb, fan_in, fan_out):
        bound = 1.0 / jnp.sqrt(fan_in)
        w = jax.random.uniform(kw, (fan_in, fan_out), jnp.float32, -bound, bound)
        b = jax.random.uniform(kb, (fan_out,), jnp.float32, -bound, bound)
        return w, b

    w1, b1 = linear(ks[0], ks[1], input_size, hidden1)
    w2, b2 = linear(ks[2], ks[3], hidden1, hidden2)
    w3, b3 = linear(ks[4], ks[5], hidden2, 1)
    return {"w1": w1, "b1": b1, "w2": w2, "b2": b2, "w3": w3, "b3": b3}


def reference_f32(x, p):
    h1 = jnp.maximum(x @ p["w1"] + p["b1"], 0.0)
    h2 = jnp.maximum(h1 @ p["w2"] + p["b2"], 0.0)
    return jax.nn.sigmoid(h2 @ p["w3"] + p["b3"])


def reference_bf16(x, p):
    """Numerics-matched reference (same bf16 casts / f32 accumulation)."""
    xb = x.astype(jnp.bfloat16)
    h1 = jnp.maximum(
        jnp.dot(xb, p["w1"].astype(jnp.bfloat16),
                preferred_element_type=jnp.float32) + p["b1"], 0.0)
    h2 = jnp.maximum(
        jnp.dot(h1.astype(jnp.bfloat16), p["w2"].astype(jnp.bfloat16),
                preferred_element_type=jnp.float32) + p["b2"], 0.0)
    logits = jnp.sum(h2 * p["w3"].reshape(1, -1), axis=-1, keepdims=True) + p["b3"]
    return jax.nn.sigmoid(logits)


if __name__ == "__main__":
    INPUT_SIZE, H1, H2 = 32, 64, 32

    key = jax.random.PRNGKey(0)
    kx1, kx2, kx3, kp = jax.random.split(key, 4)
    params = init_params(kp, INPUT_SIZE, H1, H2)

    # Case 1: tiny batch -> single full-extent block, single grid step.
    x1 = jax.random.normal(kx1, (8, INPUT_SIZE), jnp.float32)
    out1 = jax.block_until_ready(bot_detect_mlp(x1, params))
    assert out1.shape == (8, 1), out1.shape
    assert jnp.allclose(out1, reference_bf16(x1, params), atol=1e-4, rtol=1e-4)
    assert jnp.allclose(out1, reference_f32(x1, params), atol=2e-2)

    # Case 2: ragged batch, auto-chosen tile (256) -> 2-step grid, masked tail.
    x2 = jax.random.normal(kx2, (300, INPUT_SIZE), jnp.float32)
    out2 = jax.block_until_ready(bot_detect_mlp(x2, params))
    assert out2.shape == (300, 1), out2.shape
    assert jnp.allclose(out2, reference_bf16(x2, params), atol=1e-4, rtol=1e-4)
    assert jnp.allclose(out2, reference_f32(x2, params), atol=2e-2)

    # Case 3: longer ragged batch with an explicit smaller tile (4 grid steps).
    x3 = jax.random.normal(kx3, (1000, INPUT_SIZE), jnp.float32)
    out3 = jax.block_until_ready(bot_detect_mlp(x3, params, tile_b=256))
    assert out3.shape == (1000, 1), out3.shape
    assert jnp.allclose(out3, reference_bf16(x3, params), atol=1e-4, rtol=1e-4)
    assert jnp.allclose(out3, reference_f32(x3, params), atol=2e-2)

    print("KERNEL_OK")
</pallas_src>

<mosaic_0001>
module attributes {stable_mosaic.version = 11 : i64} {
  func.func @_mlp_kernel(%arg0: i32, %arg1: memref<8x32xf32, #tpu.memory_space<vmem>>, %arg2: memref<64x32xbf16, #tpu.memory_space<vmem>>, %arg3: memref<64x1xf32, #tpu.memory_space<vmem>>, %arg4: memref<32x64xbf16, #tpu.memory_space<vmem>>, %arg5: memref<32x1xf32, #tpu.memory_space<vmem>>, %arg6: memref<32x1xf32, #tpu.memory_space<vmem>>, %arg7: memref<1x1xf32, #tpu.memory_space<smem>>, %arg8: memref<1x8xf32, #tpu.memory_space<vmem>>) attributes {dimension_semantics = [#tpu.dimension_semantics<parallel>], iteration_bounds = array<i64: 1>, scalar_prefetch = 0 : i64, scratch_operands = 0 : i64, tpu.core_type = #tpu.core_type<tc>, window_params = [{transform_indices = @transform_0, window_bounds = array<i64: 8, 32>}, {pipeline_mode = #tpu.pipeline_mode<synchronous>, transform_indices = @transform_1, window_bounds = array<i64: 64, 32>}, {pipeline_mode = #tpu.pipeline_mode<synchronous>, transform_indices = @transform_2, window_bounds = array<i64: 64, 1>}, {pipeline_mode = #tpu.pipeline_mode<synchronous>, transform_indices = @transform_3, window_bounds = array<i64: 32, 64>}, {pipeline_mode = #tpu.pipeline_mode<synchronous>, transform_indices = @transform_4, window_bounds = array<i64: 32, 1>}, {pipeline_mode = #tpu.pipeline_mode<synchronous>, transform_indices = @transform_5, window_bounds = array<i64: 32, 1>}, {transform_indices = @transform_6, window_bounds = array<i64: 1, 1>}, {transform_indices = @transform_7, window_bounds = array<i64: 1, 8>}]} {
    %c0 = arith.constant 0 : index
    %c0_0 = arith.constant 0 : index
    %0 = vector.load %arg1[%c0, %c0_0] : memref<8x32xf32, #tpu.memory_space<vmem>>, vector<8x32xf32>
    %1 = arith.truncf %0 : vector<8x32xf32> to vector<8x32xbf16>
    %c0_1 = arith.constant 0 : index
    %c0_2 = arith.constant 0 : index
    %2 = vector.load %arg2[%c0_1, %c0_2] : memref<64x32xbf16, #tpu.memory_space<vmem>>, vector<64x32xbf16>
    %cst = arith.constant dense<0.000000e+00> : vector<64x8xf32>
    %3 = tpu.matmul %2, %1, %cst {dimension_numbers = #tpu.dot_dimension_numbers<[1], [1], [0], [0], [0, 0, 1, 0], [], []>} : vector<64x32xbf16>, vector<8x32xbf16>, vector<64x8xf32> -> vector<64x8xf32>
    %c0_3 = arith.constant 0 : index
    %c0_4 = arith.constant 0 : index
    %4 = vector.load %arg3[%c0_3, %c0_4] : memref<64x1xf32, #tpu.memory_space<vmem>>, vector<64x1xf32>
    %5 = vector.broadcast %4 : vector<64x1xf32> to vector<64x8xf32>
    %6 = arith.addf %3, %5 : vector<64x8xf32>
    %cst_5 = arith.constant 0.000000e+00 : f32
    %7 = vector.broadcast %cst_5 : f32 to vector<64x8xf32>
    %8 = arith.maximumf %6, %7 : vector<64x8xf32>
    %c0_6 = arith.constant 0 : index
    %c0_7 = arith.constant 0 : index
    %9 = vector.load %arg4[%c0_6, %c0_7] : memref<32x64xbf16, #tpu.memory_space<vmem>>, vector<32x64xbf16>
    %10 = arith.truncf %8 : vector<64x8xf32> to vector<64x8xbf16>
    %cst_8 = arith.constant dense<0.000000e+00> : vector<32x8xf32>
    %11 = tpu.matmul %9, %10, %cst_8 {dimension_numbers = #tpu.dot_dimension_numbers<[1], [0], [0], [1], [0, 0, 1, 1], [], []>} : vector<32x64xbf16>, vector<64x8xbf16>, vector<32x8xf32> -> vector<32x8xf32>
    %c0_9 = arith.constant 0 : index
    %c0_10 = arith.constant 0 : index
    %12 = vector.load %arg5[%c0_9, %c0_10] : memref<32x1xf32, #tpu.memory_space<vmem>>, vector<32x1xf32>
    %13 = vector.broadcast %12 : vector<32x1xf32> to vector<32x8xf32>
    %14 = arith.addf %11, %13 : vector<32x8xf32>
    %cst_11 = arith.constant 0.000000e+00 : f32
    %15 = vector.broadcast %cst_11 : f32 to vector<32x8xf32>
    %16 = arith.maximumf %14, %15 : vector<32x8xf32>
    %c0_12 = arith.constant 0 : index
    %c0_13 = arith.constant 0 : index
    %17 = vector.load %arg6[%c0_12, %c0_13] : memref<32x1xf32, #tpu.memory_space<vmem>>, vector<32x1xf32>
    %18 = vector.broadcast %17 : vector<32x1xf32> to vector<32x8xf32>
    %19 = arith.mulf %16, %18 : vector<32x8xf32>
    %cst_14 = arith.constant dense<0.000000e+00> : vector<8xf32>
    %20 = vector.multi_reduction <add>, %19, %cst_14 [0] : vector<32x8xf32> to vector<8xf32>
    %21 = vector.shape_cast %20 : vector<8xf32> to vector<1x8xf32>
    %c0_15 = arith.constant 0 : index
    %c0_16 = arith.constant 0 : index
    %22 = memref.load %arg7[%c0_15, %c0_16] : memref<1x1xf32, #tpu.memory_space<smem>>
    %23 = vector.broadcast %22 : f32 to vector<1x8xf32>
    %24 = arith.addf %21, %23 : vector<1x8xf32>
    %25 = arith.negf %24 : vector<1x8xf32>
    %26 = math.exp %25 : vector<1x8xf32>
    %cst_17 = arith.constant 1.000000e+00 : f32
    %27 = vector.broadcast %cst_17 : f32 to vector<1x8xf32>
    %28 = arith.addf %27, %26 : vector<1x8xf32>
    %29 = arith.divf %27, %28 : vector<1x8xf32>
    %c0_18 = arith.constant 0 : index
    %c0_19 = arith.constant 0 : index
    %30 = vector.load %arg8[%c0_18, %c0_19] : memref<1x8xf32, #tpu.memory_space<vmem>>, vector<1x8xf32>
    tpu.vector_store %arg8[%c0_18, %c0_19], %29 {strides = array<i32>} : memref<1x8xf32, #tpu.memory_space<vmem>>, vector<1x8xf32>,
    return
  }
  func.func @transform_0(%arg0: i32) -> (i32, i32) {
    %c0_i32 = arith.constant 0 : i32
    %c0_i32_0 = arith.constant 0 : i32
    return %arg0, %c0_i32 : i32, i32
  }
  func.func @transform_1(%arg0: i32) -> (i32, i32) {
    %c0_i32 = arith.constant 0 : i32
    %c0_i32_0 = arith.constant 0 : i32
    %c0_i32_1 = arith.constant 0 : i32
    return %c0_i32, %c0_i32_0 : i32, i32
  }
  func.func @transform_2(%arg0: i32) -> (i32, i32) {
    %c0_i32 = arith.constant 0 : i32
    %c0_i32_0 = arith.constant 0 : i32
    %c0_i32_1 = arith.constant 0 : i32
    return %c0_i32, %c0_i32_0 : i32, i32
  }
  func.func @transform_3(%arg0: i32) -> (i32, i32) {
    %c0_i32 = arith.constant 0 : i32
    %c0_i32_0 = arith.constant 0 : i32
    %c0_i32_1 = arith.constant 0 : i32
    return %c0_i32, %c0_i32_0 : i32, i32
  }
  func.func @transform_4(%arg0: i32) -> (i32, i32) {
    %c0_i32 = arith.constant 0 : i32
    %c0_i32_0 = arith.constant 0 : i32
    %c0_i32_1 = arith.constant 0 : i32
    return %c0_i32, %c0_i32_0 : i32, i32
  }
  func.func @transform_5(%arg0: i32) -> (i32, i32) {
    %c0_i32 = arith.constant 0 : i32
    %c0_i32_0 = arith.constant 0 : i32
    %c0_i32_1 = arith.constant 0 : i32
    return %c0_i32, %c0_i32_0 : i32, i32
  }
  func.func @transform_6(%arg0: i32) -> (i32, i32) {
    %c0_i32 = arith.constant 0 : i32
    %c0_i32_0 = arith.constant 0 : i32
    %c0_i32_1 = arith.constant 0 : i32
    return %c0_i32, %c0_i32_0 : i32, i32
  }
  func.func @transform_7(%arg0: i32) -> (i32, i32) {
    %c0_i32 = arith.constant 0 : i32
    %c0_i32_0 = arith.constant 0 : i32
    return %c0_i32, %arg0 : i32, i32
  }
}

</mosaic_0001>

<llo_original>
// kernel: tpu_custom_call.1
$region0: #{tpu_custom_call.1}
  #allocation0 [shape = 'u32[]', space=smem, size = 0x4, offset = 0x4, fixed_abs, tag = 'smem constant byte address 0x4 - core index']
  #allocation1 [shape = 'u32[72,128]{1,0:T(1,128)}', space=vmem, size = 0x9000, scoped, tag = 'internal scratch']
  #allocation2 [shape = 'f32[1,1]{1,0:T(1,128)S(6)}', space=smem, size = 0x200, scoped, tag = 'scoped memory for tpu_custom_call.1']
  %s0 = inlined_call_operand.vmem [shape: f32[8,32], index: 0, kind: input, shape index: {}]
  %s1 = inlined_call_operand.vmem [shape: bf16[64,32], index: 1, kind: input, shape index: {}]
  %s2 = inlined_call_operand.vmem [shape: f32[64,1], index: 2, kind: input, shape index: {}]
  %s3 = inlined_call_operand.vmem [shape: bf16[32,64], index: 3, kind: input, shape index: {}]
  %s4 = inlined_call_operand.vmem [shape: f32[32,1], index: 4, kind: input, shape index: {}]
  %s5 = inlined_call_operand.vmem [shape: f32[32,1], index: 5, kind: input, shape index: {}]
  %s6 = inlined_call_operand.<no memory space> [shape: f32[1,1], index: 6, kind: input, shape index: {}]
  %s7 = inlined_call_operand.hbm [shape: f32[1,8], index: 7, kind: output, shape index: {}]
  %s8 = sld [smem:[#allocation0]]
  $region38: #{tpu_custom_call.1} parent=0
    _
  %s10 = ssub.s32 1, %s8
  %s11 = scalar_select 0, %s10, %s8
  %12 = sst [smem:[#allocation2]] %s6
  $region1: #{tpu_custom_call.1} parent=0
    #allocation3 [shape = 'u8[512]{0}', space=vmem, size = 0x400, scoped, tag = 'output window, operand 0, single buffered']
    #allocation4 [shape = 's32[1]{0}', space=sflag, size = 0x4, scoped, tag = 'scoped memory for tpu_custom_call.1']
    %13 = vsyncpa [#allocation4], 0
    // Predicated region
    $region2: #{tpu_custom_call.1} parent=1 // pred_check
      _
    $region3: #{tpu_custom_call.1} parent=1 // pred_check_branch
      %15 = sbr.rel (0) target = $region5
    $region4: #{tpu_custom_call.1} parent=1 // pred_region
      _
    $region5: #{tpu_custom_call.1} parent=1 // pred_fallthru
      _
    // Predicated region
    $region6: #{tpu_custom_call.1} parent=1 // pred_check
      _
    $region7: #{tpu_custom_call.1} parent=1 // pred_check_branch
      %17 = sbr.rel (0) target = $region9
    $region8: #{tpu_custom_call.1} parent=1 // pred_region
      _
    $region9: #{tpu_custom_call.1} parent=1 // pred_fallthru
      _
    // Predicated region
    $region10: #{tpu_custom_call.1} parent=1 // pred_check
      _
    $region11: #{tpu_custom_call.1} parent=1 // pred_check_branch
      %19 = sbr.rel (0) target = $region13
    $region12: #{tpu_custom_call.1} parent=1 // pred_region
      _
    $region13: #{tpu_custom_call.1} parent=1 // pred_fallthru
      _
    // Predicated region
    $region14: #{tpu_custom_call.1} parent=1 // pred_check
      _
    $region15: #{tpu_custom_call.1} parent=1 // pred_check_branch
      %21 = sbr.rel (0) target = $region17
    $region16: #{tpu_custom_call.1} parent=1 // pred_region
      _
    $region17: #{tpu_custom_call.1} parent=1 // pred_fallthru
      _
    // Predicated region
    $region18: #{tpu_custom_call.1} parent=1 // pred_check
      _
    $region19: #{tpu_custom_call.1} parent=1 // pred_check_branch
      %23 = sbr.rel (0) target = $region21
    $region20: #{tpu_custom_call.1} parent=1 // pred_region
      _
    $region21: #{tpu_custom_call.1} parent=1 // pred_fallthru
      _
    // Predicated region
    $region22: #{tpu_custom_call.1} parent=1 // pred_check
      _
    $region23: #{tpu_custom_call.1} parent=1 // pred_check_branch
      %25 = sbr.rel (0) target = $region25
    $region24: #{tpu_custom_call.1} parent=1 // pred_region
      _
    $region25: #{tpu_custom_call.1} parent=1 // pred_fallthru
      _
    // Predicated region
    $region26: #{tpu_custom_call.1} parent=1 // pred_check
      _
    $region27: #{tpu_custom_call.1} parent=1 // pred_check_branch
      %27 = sbr.rel (0) target = $region29
    $region28: #{tpu_custom_call.1} parent=1 // pred_region
      _
    $region29: #{tpu_custom_call.1} parent=1 // pred_fallthru
      _
    %v29 = vld [vmem:[%s0] sm:$0xff]
    %v30 = vpack.c.bf16 %v29, %v29
    %v31 = vld [vmem:[%s1] sm:$0xf]
    %v32 = vld [vmem:[%s1 + $0x4] sm:$0xf]
    %v33 = vld [vmem:[%s1 + $0x8] sm:$0xf]
    %v34 = vld [vmem:[%s1 + $0xc] sm:$0xf]
    %v35 = vld [vmem:[%s1 + $0x10] sm:$0xf]
    %v36 = vld [vmem:[%s1 + $0x14] sm:$0xf]
    %v37 = vld [vmem:[%s1 + $0x18] sm:$0xf]
    %v38 = vld [vmem:[%s1 + $0x1c] sm:$0xf]
    %v39 = vld [vmem:[%s2] sm:$0xff]
    %v40 = vld [vmem:[%s2 + $0x8] sm:$0xff]
    %v41 = vld [vmem:[%s2 + $0x10] sm:$0xff]
    %v42 = vld [vmem:[%s2 + $0x18] sm:$0xff]
    %v43 = vld [vmem:[%s2 + $0x20] sm:$0xff]
    %v44 = vld [vmem:[%s2 + $0x28] sm:$0xff]
    %v45 = vld [vmem:[%s2 + $0x30] sm:$0xff]
    %v46 = vld [vmem:[%s2 + $0x38] sm:$0xff]
    %48 = vset.pattern.permute.xlu0 0
    %49 = vperm.xlu0 %48, %v39
    %v50 = vpop.permute.xlu0 %49
    %53 = vset.pattern.permute.xlu0 0
    %54 = vperm.xlu0 %53, %v40
    %v55 = vpop.permute.xlu0 %54
    %58 = vset.pattern.permute.xlu0 0
    %59 = vperm.xlu0 %58, %v41
    %v60 = vpop.permute.xlu0 %59
    %63 = vset.pattern.permute.xlu0 0
    %64 = vperm.xlu0 %63, %v42
    %v65 = vpop.permute.xlu0 %64
    %68 = vset.pattern.permute.xlu0 0
    %69 = vperm.xlu0 %68, %v43
    %v70 = vpop.permute.xlu0 %69
    %73 = vset.pattern.permute.xlu0 0
    %74 = vperm.xlu0 %73, %v44
    %v75 = vpop.permute.xlu0 %74
    %78 = vset.pattern.permute.xlu0 0
    %79 = vperm.xlu0 %78, %v45
    %v80 = vpop.permute.xlu0 %79
    %83 = vset.pattern.permute.xlu0 0
    %84 = vperm.xlu0 %83, %v46
    %v85 = vpop.permute.xlu0 %84
    %v95 = vunpack.c.l.b16 %v31
    %v96 = vunpack.c.l.b16 %v32
    %v97 = vunpack.c.l.b16 %v33
    %v98 = vunpack.c.l.b16 %v34
    %v99 = vunpack.c.l.b16 %v35
    %v100 = vunpack.c.l.b16 %v36
    %v101 = vunpack.c.l.b16 %v37
    %v102 = vunpack.c.l.b16 %v38
    %v103 = vpack.c.b16 %v96, %v95
    %v104 = vpack.c.b16 %v98, %v97
    %v105 = vpack.c.b16 %v100, %v99
    %v106 = vpack.c.b16 %v102, %v101
    %vm107 = vcmask 261120
    %v109 = vsel %vm107, %v103, 0
    %v112 = vsel %vm107, %v104, 0
    %v115 = vsel %vm107, %v105, 0
    %v118 = vsel %vm107, %v106, 0
    %v121 = vsel %vm107, %v30, 0
    %123 = vmatpush.bf16.xpose.msra.mxu0 0
    %124 = vmatpush.bf16.xpose.msra.mxu0 0
    %125 = vmatpush.bf16.xpose.msra.mxu0 0
    %126 = vmatpush.bf16.xpose.msra.mxu0 0
    %127 = vmatpush.bf16.xpose.msra.mxu0 0
    %128 = vmatpush.bf16.xpose.msra.mxu0 0
    %129 = vmatpush.bf16.xpose.msra.mxu0 0
    %130 = vmatpush.bf16.xpose.msra.mxu0 %v121
    %131 = vmatmul.bf16.gmra.mxu0 %v109
    %v132 = vpop.f32.mrf.mxu0
    %v133 = vadd.f32 %v50, %v132
    %v134 = vpop.f32.mrf.mxu0
    %v135 = vadd.f32 %v55, %v134
    %136 = vmatmul.bf16.gmra.mxu0 %v112
    %v137 = vpop.f32.mrf.mxu0
    %v138 = vadd.f32 %v60, %v137
    %v139 = vpop.f32.mrf.mxu0
    %v140 = vadd.f32 %v65, %v139
    %141 = vmatmul.bf16.gmra.mxu0 %v115
    %v142 = vpop.f32.mrf.mxu0
    %v143 = vadd.f32 %v70, %v142
    %v144 = vpop.f32.mrf.mxu0
    %v145 = vadd.f32 %v75, %v144
    %146 = vmatmul.bf16.gmra.mxu0 %v118
    %v147 = vpop.f32.mrf.mxu0
    %v148 = vadd.f32 %v80, %v147
    %v149 = vpop.f32.mrf.mxu0
    %v150 = vadd.f32 %v85, %v149
    %151 = vdwg.mxu0
    %v152 = vmax.f32 %v133, 0.0
    %v153 = vmax.f32 %v135, 0.0
    %v154 = vmax.f32 %v138, 0.0
    %v155 = vmax.f32 %v140, 0.0
    %v156 = vmax.f32 %v143, 0.0
    %v157 = vmax.f32 %v145, 0.0
    %v158 = vmax.f32 %v148, 0.0
    %v159 = vmax.f32 %v150, 0.0
    %v160 = vld [vmem:[%s3] sm:$0xf]
    %v161 = vld [vmem:[%s3 + $0x4] sm:$0xf]
    %v162 = vld [vmem:[%s3 + $0x8] sm:$0xf]
    %v163 = vld [vmem:[%s3 + $0xc] sm:$0xf]
    %v164 = vpack.c.bf16 %v153, %v152
    %v165 = vpack.c.bf16 %v155, %v154
    %v166 = vpack.c.bf16 %v157, %v156
    %v167 = vpack.c.bf16 %v159, %v158
    %v168 = vld [vmem:[%s4] sm:$0xff]
    %v169 = vld [vmem:[%s4 + $0x8] sm:$0xff]
    %v170 = vld [vmem:[%s4 + $0x10] sm:$0xff]
    %v171 = vld [vmem:[%s4 + $0x18] sm:$0xff]
    %173 = vset.pattern.permute.xlu0 0
    %174 = vperm.xlu0 %173, %v168
    %v175 = vpop.permute.xlu0 %174
    %178 = vset.pattern.permute.xlu0 0
    %179 = vperm.xlu0 %178, %v169
    %v180 = vpop.permute.xlu0 %179
    %183 = vset.pattern.permute.xlu0 0
    %184 = vperm.xlu0 %183, %v170
    %v185 = vpop.permute.xlu0 %184
    %188 = vset.pattern.permute.xlu0 0
    %189 = vperm.xlu0 %188, %v171
    %v190 = vpop.permute.xlu0 %189
    %v196 = vunpack.c.l.b16 %v160
    %v197 = vunpack.c.l.b16 %v161
    %v198 = vunpack.c.l.b16 %v162
    %v199 = vunpack.c.l.b16 %v163
    %v200 = vpack.c.b16 %v197, %v196
    %v201 = vpack.c.b16 %v199, %v198
    %vm202 = vcmask 523264
    %v204 = vsel %vm202, %v200, 0
    %v207 = vsel %vm202, %v201, 0
    %209 = vmatpush.bf16.msra.mxu0 0
    %210 = vmatpush.bf16.msra.mxu0 0
    %211 = vmatpush.bf16.msra.mxu0 0
    %212 = vmatpush.bf16.msra.mxu0 0
    %213 = vmatpush.bf16.msra.mxu0 %v167
    %214 = vmatpush.bf16.msra.mxu0 %v166
    %215 = vmatpush.bf16.msra.mxu0 %v165
    %216 = vmatpush.bf16.msra.mxu0 %v164
    %217 = vmatmul.bf16.gmra.mxu0 %v204
    %v218 = vpop.f32.mrf.mxu0
    %v219 = vadd.f32 %v175, %v218
    %v220 = vpop.f32.mrf.mxu0
    %v221 = vadd.f32 %v180, %v220
    %222 = vmatmul.bf16.gmra.mxu0 %v207
    %v223 = vpop.f32.mrf.mxu0
    %v224 = vadd.f32 %v185, %v223
    %v225 = vpop.f32.mrf.mxu0
    %v226 = vadd.f32 %v190, %v225
    %227 = vdwg.mxu0
    %v228 = vmax.f32 %v219, 0.0
    %v229 = vmax.f32 %v221, 0.0
    %v230 = vmax.f32 %v224, 0.0
    %v231 = vmax.f32 %v226, 0.0
    %v232 = vld [vmem:[%s5] sm:$0xff]
    %v233 = vld [vmem:[%s5 + $0x8] sm:$0xff]
    %v234 = vld [vmem:[%s5 + $0x10] sm:$0xff]
    %v235 = vld [vmem:[%s5 + $0x18] sm:$0xff]
    %237 = vset.pattern.permute.xlu0 0
    %238 = vperm.xlu0 %237, %v232
    %v239 = vpop.permute.xlu0 %238
    %242 = vset.pattern.permute.xlu0 0
    %243 = vperm.xlu0 %242, %v233
    %v244 = vpop.permute.xlu0 %243
    %247 = vset.pattern.permute.xlu0 0
    %248 = vperm.xlu0 %247, %v234
    %v249 = vpop.permute.xlu0 %248
    %252 = vset.pattern.permute.xlu0 0
    %253 = vperm.xlu0 %252, %v235
    %v254 = vpop.permute.xlu0 %253
    %v256 = vmul.f32 %v228, %v239
    %v257 = vmul.f32 %v229, %v244
    %v258 = vmul.f32 %v230, %v249
    %v259 = vmul.f32 %v231, %v254
    %vm260 = vcmask 64512
    %v261 = vsel %vm260, %v256, 0.0
    %v262 = vsel %vm260, %v257, 0.0
    %v263 = vadd.f32 %v261, %v262
    %v264 = vsel %vm260, %v258, 0.0
    %v265 = vadd.f32 %v263, %v264
    %v266 = vsel %vm260, %v259, 0.0
    %v267 = vadd.f32 %v265, %v266
    %v268 = vrot.slane %v267, 4
    %v269 = vadd.f32 %v267, %v268
    %v270 = vrot.slane %v269, 2
    %v271 = vadd.f32 %v269, %v270
    %v272 = vrot.slane %v271, 1
    %v273 = vadd.f32 %v271, %v272
    %s274 = sld [smem:[#allocation2]]
    %v275 = vstv %s274
    %v276 = vadd.f32 %v273, %v275
    %v277 = vxor.u32 %v276, 2147483648
    %v278 = vmul.f32 %v277, 1.442695
    %v279 = vpow.pop %v278
    %v280 = vadd.f32 %v279, 1.0
    %v281 = vrcp.pop %v280
    %v282 = vmul.f32 %v280, %v281
    %v283 = vsub.f32 1.0, %v282
    %v284 = vmul.f32 %v281, %v283
    %v285 = vadd.f32 %v281, %v284
    %vm286 = vweird.f32 %v280
    %vm287 = vweird.f32 %v281
    %vm288 = vmor %vm286, %vm287
    %v289 = vsel %vm288, %v281, %v285
    %v290 = vand.u32 2147483647, %v280
    %vm291 = vcmp.eq.f32.partialorder %v290, 8.507059e+37
    %v292 = vand.u32 %v280, 2147483648
    %v293 = vor.u32 1.1754944e-38, %v292
    %v294 = vsel %vm291, %v293, %v289
    %v295 = vmul.f32 1.0, %v294
    %vm296 = vcmask 57344
    %297 = vst.msk [vmem:[#allocation3] sm:$0x1] %vm296, %v295
    // Predicated region
    $region30: #{tpu_custom_call.1} parent=1 // pred_check
      _
    $region31: #{tpu_custom_call.1} parent=1 // pred_check_branch
      %299 = sbr.rel (0) target = $region33
    $region32: #{tpu_custom_call.1} parent=1 // pred_region
      %301 = vsyncadd [#allocation4], 0
      %s303 = sshll.u32 [#allocation3], 4
      %s304 = int_to_ptr.vmem [resolvable:$true] %s303
      %s305 = sshll.u32 %s7, 4
      %s306 = int_to_ptr.hbm [resolvable:$true] %s305
      %308 = dma.vmem_to_hbm [thread:$0]  %s304, 16, %s306, [#allocation4]
    $region33: #{tpu_custom_call.1} parent=1 // pred_fallthru
      _
    // Predicated region
    $region34: #{tpu_custom_call.1} parent=1 // pred_check
      _
    $region35: #{tpu_custom_call.1} parent=1 // pred_check_branch
      %310 = sbr.rel (0) target = $region37
    $region36: #{tpu_custom_call.1} parent=1 // pred_region
      %312 = dma.done [#allocation4], 16
    $region37: #{tpu_custom_call.1} parent=1 // pred_fallthru
      _
    %313 = vsyncpa [#allocation4], 1

</llo_original>
